<compile_context>
chip_gen: v7x
topology: tpu7x:2x2x1
jax: 0.10.0
libtpu: 0.0.40
codegen_flags: <defaults>
</compile_context>

<pallas_src>
import functools
from typing import NamedTuple

import jax
import jax.numpy as jnp
from jax.experimental import pallas as pl
from jax.experimental.pallas import tpu as pltpu


def _round_up(x, m):
    return (x + m - 1) // m * m


def _cdiv(a, b):
    return -(-a // b)


def policy_nn_kernel(x_ref, w1_ref, b1_ref, w2_ref, b2_ref, w3_ref, b3_ref,
                     o_ref):
    """Whole MLP hot path (3 matmuls + ReLU + ReLU + Exp) in one kernel."""
    # Cast state to the MXU compute dtype in-register (no wrapper-side pass).
    x = x_ref[...].astype(w1_ref.dtype)

    # Layer 1: Linear + ReLU (f32 accumulate, f32 epilogue)
    h1 = jnp.dot(x, w1_ref[...], preferred_element_type=jnp.float32)
    h1 = jnp.maximum(h1 + b1_ref[...], 0.0)          # (TB, Hp) + (1, Hp)
    h1 = h1.astype(w2_ref.dtype)                      # back to MXU dtype

    # Layer 2: Linear + ReLU
    h2 = jnp.dot(h1, w2_ref[...], preferred_element_type=jnp.float32)
    h2 = jnp.maximum(h2 + b2_ref[...], 0.0)
    h2 = h2.astype(w3_ref.dtype)

    # alpha head: Linear + Exp (lane-padded outputs -> unmasked full-lane vst)
    y = jnp.dot(h2, w3_ref[...], preferred_element_type=jnp.float32)
    o_ref[...] = jnp.exp(y + b3_ref[...]).astype(o_ref.dtype)


class PreparedParams(NamedTuple):
    w1: jax.Array
    b1: jax.Array
    w2: jax.Array
    b2: jax.Array
    w3: jax.Array
    b3: jax.Array
    n_in: int
    n_hidden_pad: int
    n_out: int
    n_out_pad: int


def prepare_params(params, *, use_bf16=True):
    """Pad hidden/output widths to 128 lanes and cast to the MXU dtype ONCE.

    Zero-padded W columns/rows and zero-padded biases keep layer outputs
    bit-exact (relu(0)=0 propagates; padded exp(0)=1 lanes are sliced off).
    Call this once per parameter set and reuse the result across forwards.
    """
    w1, b1, w2, b2, w3, b3 = params
    n_in, n_hidden = w1.shape
    n_out = w3.shape[1]
    h_pad = _round_up(n_hidden, 128)
    n_out_pad = _round_up(n_out, 128)

    def pad2(a, rows, cols):
        return jnp.pad(a, ((0, rows - a.shape[0]), (0, cols - a.shape[1])))

    mxu_dtype = jnp.bfloat16 if use_bf16 else jnp.float32
    return PreparedParams(
        w1=pad2(w1, n_in, h_pad).astype(mxu_dtype),
        b1=pad2(b1, 1, h_pad).astype(jnp.float32),
        w2=pad2(w2, h_pad, h_pad).astype(mxu_dtype),
        b2=pad2(b2, 1, h_pad).astype(jnp.float32),
        w3=pad2(w3, h_pad, n_out_pad).astype(mxu_dtype),
        b3=pad2(b3, 1, n_out_pad).astype(jnp.float32),
        n_in=n_in, n_hidden_pad=h_pad, n_out=n_out, n_out_pad=n_out_pad)


def policy_nn_forward(state, prepared: PreparedParams, *, batch_tile=4096,
                      out_dtype=jnp.float32):
    """Runs PolicyNN forward via one fused pallas_call, tiled over batch."""
    B, n_in = state.shape
    assert n_in == prepared.n_in, "state feature dim mismatch"
    H = prepared.n_hidden_pad
    n_out = prepared.n_out
    n_out_pad = prepared.n_out_pad

    # --- Batch tiling. 16-row quantum (bf16 packs 16 sublanes/vreg; also a
    # multiple of the f32 quantum 8). Big tiles amortize grid-step overhead;
    # force >=2 grid steps when the batch allows so both v7x TCs get work.
    sub_q = 16
    n_steps = max(1, _cdiv(B, batch_tile))
    if B > sub_q:
        n_steps = max(n_steps, 2)
    tile = _round_up(_cdiv(B, n_steps), sub_q)
    B_pad = _round_up(B, tile)
    if B_pad != B:
        state = jnp.pad(state, ((0, B_pad - B), (0, 0)))
    grid = (B_pad // tile,)

    # --- VMEM guard: only raise the scoped limit if a huge tile needs it
    # (cap below v7x's 64 MiB physical VMEM).
    state_bytes = state.dtype.itemsize
    out_bytes = jnp.dtype(out_dtype).itemsize
    w_bytes = prepared.w1.dtype.itemsize
    weights_resident = (n_in * H + H * H + H * n_out_pad) * w_bytes \
        + (2 * H + n_out_pad) * 4
    vmem_need = (2 * tile * n_in * state_bytes      # double-buffered state
                 + 2 * tile * n_out_pad * out_bytes  # double-buffered output
                 + weights_resident)
    compiler_kwargs = dict(dimension_semantics=("parallel",))
    if vmem_need > (28 << 20):
        compiler_kwargs["vmem_limit_bytes"] = min(int(vmem_need * 1.5), 60 << 20)

    # --- Advisory cost estimate so XLA schedules the custom call well.
    flops = 2 * B_pad * (n_in * H + H * H + H * n_out_pad)
    cost = pl.CostEstimate(
        flops=flops,
        transcendentals=B_pad * n_out_pad,
        bytes_accessed=(B_pad * n_in * state_bytes
                        + B_pad * n_out_pad * out_bytes
                        + weights_resident))

    # Weights / biases are small: constant index_map -> resident across steps.
    full = lambda shape: pl.BlockSpec(shape, lambda i: (0, 0))

    # TODO(synk): on v5e, if xprof shows exposed output DMA, add
    # pipeline_mode=pl.Buffered(3) to the output BlockSpec.
    out = pl.pallas_call(
        policy_nn_kernel,
        out_shape=jax.ShapeDtypeStruct((B_pad, n_out_pad), out_dtype),
        grid=grid,
        in_specs=[
            pl.BlockSpec((tile, n_in), lambda i: (i, 0)),   # state tile (f32)
            full((n_in, H)),                                 # W1
            full((1, H)),                                    # b1
            full((H, H)),                                    # W2
            full((1, H)),                                    # b2
            full((H, n_out_pad)),                            # W3 (lane-padded)
            full((1, n_out_pad)),                            # b3 (lane-padded)
        ],
        out_specs=pl.BlockSpec((tile, n_out_pad), lambda i: (i, 0)),
        compiler_params=pltpu.CompilerParams(**compiler_kwargs),
        cost_estimate=cost,
    )(state, prepared.w1, prepared.b1, prepared.w2, prepared.b2,
      prepared.w3, prepared.b3)

    return out[:B, :n_out]


def init_params(key, n_inputs, n_hidden, n_outputs):
    """Init mimicking nn.Linear's U(-1/sqrt(fan_in), 1/sqrt(fan_in)).

    Weights are stored as (in_features, out_features) — the transpose of the
    PyTorch (out, in) convention — so the kernel can compute x @ W.
    """
    k = jax.random.split(key, 6)

    def linear(kw, kb, fan_in, fan_out):
        bound = 1.0 / jnp.sqrt(jnp.asarray(fan_in, jnp.float32))
        w = jax.random.uniform(kw, (fan_in, fan_out), jnp.float32,
                               minval=-bound, maxval=bound)
        b = jax.random.uniform(kb, (1, fan_out), jnp.float32,
                               minval=-bound, maxval=bound)
        return w, b

    w1, b1 = linear(k[0], k[1], n_inputs, n_hidden)
    w2, b2 = linear(k[2], k[3], n_hidden, n_hidden)
    w3, b3 = linear(k[4], k[5], n_hidden, n_outputs)
    return (w1, b1, w2, b2, w3, b3)


def reference_forward(state, params):
    """Pure-JAX reference for correctness checking."""
    w1, b1, w2, b2, w3, b3 = params
    h1 = jnp.maximum(state @ w1 + b1, 0.0)
    h2 = jnp.maximum(h1 @ w2 + b2, 0.0)
    return jnp.exp(h2 @ w3 + b3)


if __name__ == "__main__":
    key = jax.random.PRNGKey(0)
    k_param, k_state, k_state2 = jax.random.split(key, 3)

    batch = 8
    n_inputs = 16
    n_hidden = 32
    n_outputs = 4

    params = init_params(k_param, n_inputs, n_hidden, n_outputs)
    state = jax.random.normal(k_state, (batch, n_inputs), jnp.float32)
    ref = reference_forward(state, params)

    # Strict check on the f32 path (hidden/output padding must be exact).
    prep_f32 = prepare_params(params, use_bf16=False)
    out_f32 = jax.block_until_ready(policy_nn_forward(state, prep_f32))
    assert out_f32.shape == (batch, n_outputs)
    assert jnp.allclose(out_f32, ref, atol=1e-5, rtol=1e-5), "f32 mismatch"

    # Default performance path: bf16 MXU operands, f32 accum / bias / exp.
    prep_bf16 = prepare_params(params, use_bf16=True)
    out = jax.block_until_ready(policy_nn_forward(state, prep_bf16))
    assert out.shape == (batch, n_outputs)
    assert jnp.allclose(out, ref, atol=5e-2, rtol=5e-2), "bf16 mismatch"

    # Exercise the multi-step grid + ragged batch padding path.
    state2 = jax.random.normal(k_state2, (40, n_inputs), jnp.float32)
    ref2 = reference_forward(state2, params)
    out2 = jax.block_until_ready(
        policy_nn_forward(state2, prep_f32, batch_tile=32))
    assert out2.shape == (40, n_outputs)
    assert jnp.allclose(out2, ref2, atol=1e-5, rtol=1e-5), "ragged mismatch"

    print("KERNEL_OK")
</pallas_src>

<mosaic_0001>
module attributes {stable_mosaic.version = 11 : i64} {
  func.func @policy_nn_kernel(%arg0: i32, %arg1: memref<16x16xf32, #tpu.memory_space<vmem>>, %arg2: memref<16x128xf32, #tpu.memory_space<vmem>>, %arg3: memref<1x128xf32, #tpu.memory_space<vmem>>, %arg4: memref<128x128xf32, #tpu.memory_space<vmem>>, %arg5: memref<1x128xf32, #tpu.memory_space<vmem>>, %arg6: memref<128x128xf32, #tpu.memory_space<vmem>>, %arg7: memref<1x128xf32, #tpu.memory_space<vmem>>, %arg8: memref<16x128xf32, #tpu.memory_space<vmem>>) attributes {dimension_semantics = [#tpu.dimension_semantics<parallel>], iteration_bounds = array<i64: 1>, scalar_prefetch = 0 : i64, scratch_operands = 0 : i64, tpu.core_type = #tpu.core_type<tc>, window_params = [{transform_indices = @transform_0, window_bounds = array<i64: 16, 16>}, {pipeline_mode = #tpu.pipeline_mode<synchronous>, transform_indices = @transform_1, window_bounds = array<i64: 16, 128>}, {pipeline_mode = #tpu.pipeline_mode<synchronous>, transform_indices = @transform_2, window_bounds = array<i64: 1, 128>}, {pipeline_mode = #tpu.pipeline_mode<synchronous>, transform_indices = @transform_3, window_bounds = array<i64: 128, 128>}, {pipeline_mode = #tpu.pipeline_mode<synchronous>, transform_indices = @transform_4, window_bounds = array<i64: 1, 128>}, {pipeline_mode = #tpu.pipeline_mode<synchronous>, transform_indices = @transform_5, window_bounds = array<i64: 128, 128>}, {pipeline_mode = #tpu.pipeline_mode<synchronous>, transform_indices = @transform_6, window_bounds = array<i64: 1, 128>}, {transform_indices = @transform_7, window_bounds = array<i64: 16, 128>}]} {
    %c0 = arith.constant 0 : index
    %c0_0 = arith.constant 0 : index
    %0 = vector.load %arg1[%c0, %c0_0] : memref<16x16xf32, #tpu.memory_space<vmem>>, vector<16x16xf32>
    %c0_1 = arith.constant 0 : index
    %c0_2 = arith.constant 0 : index
    %1 = vector.load %arg2[%c0_1, %c0_2] : memref<16x128xf32, #tpu.memory_space<vmem>>, vector<16x128xf32>
    %cst = arith.constant dense<0.000000e+00> : vector<16x128xf32>
    %2 = tpu.matmul %0, %1, %cst {dimension_numbers = #tpu.dot_dimension_numbers<[1], [0], [0], [1], [0, 0, 1, 1], [], []>} : vector<16x16xf32>, vector<16x128xf32>, vector<16x128xf32> -> vector<16x128xf32>
    %c0_3 = arith.constant 0 : index
    %c0_4 = arith.constant 0 : index
    %3 = vector.load %arg3[%c0_3, %c0_4] : memref<1x128xf32, #tpu.memory_space<vmem>>, vector<1x128xf32>
    %4 = vector.broadcast %3 : vector<1x128xf32> to vector<16x128xf32>
    %5 = arith.addf %2, %4 : vector<16x128xf32>
    %cst_5 = arith.constant 0.000000e+00 : f32
    %6 = vector.broadcast %cst_5 : f32 to vector<16x128xf32>
    %7 = arith.maximumf %5, %6 : vector<16x128xf32>
    %c0_6 = arith.constant 0 : index
    %c0_7 = arith.constant 0 : index
    %8 = vector.load %arg4[%c0_6, %c0_7] : memref<128x128xf32, #tpu.memory_space<vmem>>, vector<128x128xf32>
    %cst_8 = arith.constant dense<0.000000e+00> : vector<16x128xf32>
    %9 = tpu.matmul %7, %8, %cst_8 {dimension_numbers = #tpu.dot_dimension_numbers<[1], [0], [0], [1], [0, 0, 1, 1], [], []>} : vector<16x128xf32>, vector<128x128xf32>, vector<16x128xf32> -> vector<16x128xf32>
    %c0_9 = arith.constant 0 : index
    %c0_10 = arith.constant 0 : index
    %10 = vector.load %arg5[%c0_9, %c0_10] : memref<1x128xf32, #tpu.memory_space<vmem>>, vector<1x128xf32>
    %11 = vector.broadcast %10 : vector<1x128xf32> to vector<16x128xf32>
    %12 = arith.addf %9, %11 : vector<16x128xf32>
    %cst_11 = arith.constant 0.000000e+00 : f32
    %13 = vector.broadcast %cst_11 : f32 to vector<16x128xf32>
    %14 = arith.maximumf %12, %13 : vector<16x128xf32>
    %c0_12 = arith.constant 0 : index
    %c0_13 = arith.constant 0 : index
    %15 = vector.load %arg6[%c0_12, %c0_13] : memref<128x128xf32, #tpu.memory_space<vmem>>, vector<128x128xf32>
    %cst_14 = arith.constant dense<0.000000e+00> : vector<16x128xf32>
    %16 = tpu.matmul %14, %15, %cst_14 {dimension_numbers = #tpu.dot_dimension_numbers<[1], [0], [0], [1], [0, 0, 1, 1], [], []>} : vector<16x128xf32>, vector<128x128xf32>, vector<16x128xf32> -> vector<16x128xf32>
    %c0_15 = arith.constant 0 : index
    %c0_16 = arith.constant 0 : index
    %17 = vector.load %arg7[%c0_15, %c0_16] : memref<1x128xf32, #tpu.memory_space<vmem>>, vector<1x128xf32>
    %18 = vector.broadcast %17 : vector<1x128xf32> to vector<16x128xf32>
    %19 = arith.addf %16, %18 : vector<16x128xf32>
    %20 = math.exp %19 : vector<16x128xf32>
    %c0_17 = arith.constant 0 : index
    %c0_18 = arith.constant 0 : index
    %21 = vector.load %arg8[%c0_17, %c0_18] : memref<16x128xf32, #tpu.memory_space<vmem>>, vector<16x128xf32>
    tpu.vector_store %arg8[%c0_17, %c0_18], %20 {strides = array<i32>} : memref<16x128xf32, #tpu.memory_space<vmem>>, vector<16x128xf32>,
    return
  }
  func.func @transform_0(%arg0: i32) -> (i32, i32) {
    %c0_i32 = arith.constant 0 : i32
    %c0_i32_0 = arith.constant 0 : i32
    return %arg0, %c0_i32 : i32, i32
  }
  func.func @transform_1(%arg0: i32) -> (i32, i32) {
    %c0_i32 = arith.constant 0 : i32
    %c0_i32_0 = arith.constant 0 : i32
    %c0_i32_1 = arith.constant 0 : i32
    return %c0_i32, %c0_i32_0 : i32, i32
  }
  func.func @transform_2(%arg0: i32) -> (i32, i32) {
    %c0_i32 = arith.constant 0 : i32
    %c0_i32_0 = arith.constant 0 : i32
    %c0_i32_1 = arith.constant 0 : i32
    return %c0_i32, %c0_i32_0 : i32, i32
  }
  func.func @transform_3(%arg0: i32) -> (i32, i32) {
    %c0_i32 = arith.constant 0 : i32
    %c0_i32_0 = arith.constant 0 : i32
    %c0_i32_1 = arith.constant 0 : i32
    return %c0_i32, %c0_i32_0 : i32, i32
  }
  func.func @transform_4(%arg0: i32) -> (i32, i32) {
    %c0_i32 = arith.constant 0 : i32
    %c0_i32_0 = arith.constant 0 : i32
    %c0_i32_1 = arith.constant 0 : i32
    return %c0_i32, %c0_i32_0 : i32, i32
  }
  func.func @transform_5(%arg0: i32) -> (i32, i32) {
    %c0_i32 = arith.constant 0 : i32
    %c0_i32_0 = arith.constant 0 : i32
    %c0_i32_1 = arith.constant 0 : i32
    return %c0_i32, %c0_i32_0 : i32, i32
  }
  func.func @transform_6(%arg0: i32) -> (i32, i32) {
    %c0_i32 = arith.constant 0 : i32
    %c0_i32_0 = arith.constant 0 : i32
    %c0_i32_1 = arith.constant 0 : i32
    return %c0_i32, %c0_i32_0 : i32, i32
  }
  func.func @transform_7(%arg0: i32) -> (i32, i32) {
    %c0_i32 = arith.constant 0 : i32
    %c0_i32_0 = arith.constant 0 : i32
    return %arg0, %c0_i32 : i32, i32
  }
}

</mosaic_0001>

<llo_original>
// kernel: tpu_custom_call.1
$region0: #{tpu_custom_call.1}
  #allocation0 [shape = 'u32[]', space=smem, size = 0x4, offset = 0x4, fixed_abs, tag = 'smem constant byte address 0x4 - core index']
  #allocation1 [shape = 'u32[144,128]{1,0:T(1,128)}', space=vmem, size = 0x12000, scoped, tag = 'internal scratch']
  %s0 = inlined_call_operand.hbm [shape: f32[16,16], index: 0, kind: input, shape index: {}]
  %s1 = inlined_call_operand.hbm [shape: f32[16,128], index: 1, kind: input, shape index: {}]
  %s2 = inlined_call_operand.vmem [shape: f32[1,128], index: 2, kind: input, shape index: {}]
  %s3 = inlined_call_operand.hbm [shape: f32[128,128], index: 3, kind: input, shape index: {}]
  %s4 = inlined_call_operand.vmem [shape: f32[1,128], index: 4, kind: input, shape index: {}]
  %s5 = inlined_call_operand.hbm [shape: f32[128,128], index: 5, kind: input, shape index: {}]
  %s6 = inlined_call_operand.vmem [shape: f32[1,128], index: 6, kind: input, shape index: {}]
  %s7 = inlined_call_operand.hbm [shape: f32[16,128], index: 7, kind: output, shape index: {}]
  %s8 = sld [smem:[#allocation0]]
  $region54: #{tpu_custom_call.1} parent=0
    _
  %s10 = ssub.s32 1, %s8
  %s11 = scalar_select 0, %s10, %s8
  $region1: #{tpu_custom_call.1} parent=0
    #allocation2 [shape = 'u8[8192]{0}', space=vmem, size = 0x2000, scoped, tag = 'input window, operand 0, single buffered']
    #allocation3 [shape = 's32[1]{0}', space=sflag, size = 0x4, scoped, tag = 'scoped memory for tpu_custom_call.1']
    #allocation4 [shape = 's32[1]{0}', space=sflag, size = 0x4, scoped, tag = 'scoped memory for tpu_custom_call.1']
    #allocation5 [shape = 'u8[8192]{0}', space=vmem, size = 0x2000, scoped, tag = 'input window, operand 1, single buffered']
    #allocation6 [shape = 's32[1]{0}', space=sflag, size = 0x4, scoped, tag = 'scoped memory for tpu_custom_call.1']
    #allocation7 [shape = 'u8[65536]{0}', space=vmem, size = 0x10000, scoped, tag = 'input window, operand 3, single buffered']
    #allocation8 [shape = 'u8[65536]{0}', space=vmem, size = 0x10000, scoped, tag = 'input window, operand 5, single buffered']
    #allocation9 [shape = 's32[1]{0}', space=sflag, size = 0x4, scoped, tag = 'scoped memory for tpu_custom_call.1']
    #allocation10 [shape = 'u8[8192]{0}', space=vmem, size = 0x2000, scoped, tag = 'output window, operand 0, single buffered']
    %12 = vsyncpa [#allocation3], 0
    %13 = vsyncpa [#allocation6], 0
    %14 = vsyncpa [#allocation9], 0
    %15 = vsyncpa [#allocation4], 0
    // Predicated region
    $region2: #{tpu_custom_call.1} parent=1 // pred_check
      _
    $region3: #{tpu_custom_call.1} parent=1 // pred_check_branch
      %17 = sbr.rel (0) target = $region5
    $region4: #{tpu_custom_call.1} parent=1 // pred_region
      %s19 = ssub.s32 256, 256
      %20 = vsyncadd [#allocation3], %s19
      %s21 = sshll.u32 [#allocation2], 4
      %s22 = int_to_ptr.vmem [resolvable:$true] %s21
      %27 = dma.hbm_to_vmem [thread:$0]  %s0, 256, %s22, [#allocation3], 128, 128, 8
    $region5: #{tpu_custom_call.1} parent=1 // pred_fallthru
      _
    // Predicated region
    $region6: #{tpu_custom_call.1} parent=1 // pred_check
      _
    $region7: #{tpu_custom_call.1} parent=1 // pred_check_branch
      %29 = sbr.rel (0) target = $region9
    $region8: #{tpu_custom_call.1} parent=1 // pred_region
      %s31 = ssub.s32 256, 256
      %32 = vsyncadd [#allocation6], %s31
      %s33 = sshll.u32 [#allocation5], 4
      %s34 = int_to_ptr.vmem [resolvable:$true] %s33
      %39 = dma.hbm_to_vmem [thread:$0]  %s1, 256, %s34, [#allocation6], 128, 128, 8
    $region9: #{tpu_custom_call.1} parent=1 // pred_fallthru
      _
    // Predicated region
    $region10: #{tpu_custom_call.1} parent=1 // pred_check
      _
    $region11: #{tpu_custom_call.1} parent=1 // pred_check_branch
      %41 = sbr.rel (0) target = $region13
    $region12: #{tpu_custom_call.1} parent=1 // pred_region
      _
    $region13: #{tpu_custom_call.1} parent=1 // pred_fallthru
      _
    // Predicated region
    $region14: #{tpu_custom_call.1} parent=1 // pred_check
      _
    $region15: #{tpu_custom_call.1} parent=1 // pred_check_branch
      %43 = sbr.rel (0) target = $region17
    $region16: #{tpu_custom_call.1} parent=1 // pred_region
      %s45 = ssub.s32 2048, 2048
      %46 = vsyncadd [#allocation6], %s45
      %s47 = sshll.u32 [#allocation7], 4
      %s48 = int_to_ptr.vmem [resolvable:$true] %s47
      %53 = dma.hbm_to_vmem [thread:$0]  %s3, 2048, %s48, [#allocation6], 128, 128, 8
    $region17: #{tpu_custom_call.1} parent=1 // pred_fallthru
      _
    // Predicated region
    $region18: #{tpu_custom_call.1} parent=1 // pred_check
      _
    $region19: #{tpu_custom_call.1} parent=1 // pred_check_branch
      %55 = sbr.rel (0) target = $region21
    $region20: #{tpu_custom_call.1} parent=1 // pred_region
      _
    $region21: #{tpu_custom_call.1} parent=1 // pred_fallthru
      _
    // Predicated region
    $region22: #{tpu_custom_call.1} parent=1 // pred_check
      _
    $region23: #{tpu_custom_call.1} parent=1 // pred_check_branch
      %57 = sbr.rel (0) target = $region25
    $region24: #{tpu_custom_call.1} parent=1 // pred_region
      %s59 = ssub.s32 2048, 2048
      %60 = vsyncadd [#allocation9], %s59
      %s61 = sshll.u32 [#allocation8], 4
      %s62 = int_to_ptr.vmem [resolvable:$true] %s61
      %67 = dma.hbm_to_vmem [thread:$0]  %s5, 2048, %s62, [#allocation9], 128, 128, 8
    $region25: #{tpu_custom_call.1} parent=1 // pred_fallthru
      _
    // Predicated region
    $region26: #{tpu_custom_call.1} parent=1 // pred_check
      _
    $region27: #{tpu_custom_call.1} parent=1 // pred_check_branch
      %69 = sbr.rel (0) target = $region29
    $region28: #{tpu_custom_call.1} parent=1 // pred_region
      _
    $region29: #{tpu_custom_call.1} parent=1 // pred_fallthru
      _
    // Predicated region
    $region30: #{tpu_custom_call.1} parent=1 // pred_check
      _
    $region31: #{tpu_custom_call.1} parent=1 // pred_check_branch
      %71 = sbr.rel (0) target = $region33
    $region32: #{tpu_custom_call.1} parent=1 // pred_region
      %72 = dma.done [#allocation3], 256
    $region33: #{tpu_custom_call.1} parent=1 // pred_fallthru
      _
    // Predicated region
    $region34: #{tpu_custom_call.1} parent=1 // pred_check
      _
    $region35: #{tpu_custom_call.1} parent=1 // pred_check_branch
      %74 = sbr.rel (0) target = $region37
    $region36: #{tpu_custom_call.1} parent=1 // pred_region
      %75 = dma.done [#allocation6], 256
    $region37: #{tpu_custom_call.1} parent=1 // pred_fallthru
      _
    // Predicated region
    $region38: #{tpu_custom_call.1} parent=1 // pred_check
      _
    $region39: #{tpu_custom_call.1} parent=1 // pred_check_branch
      %77 = sbr.rel (0) target = $region41
    $region40: #{tpu_custom_call.1} parent=1 // pred_region
      %78 = dma.done [#allocation6], 2048
    $region41: #{tpu_custom_call.1} parent=1 // pred_fallthru
      _
    // Predicated region
    $region42: #{tpu_custom_call.1} parent=1 // pred_check
      _
    $region43: #{tpu_custom_call.1} parent=1 // pred_check_branch
      %80 = sbr.rel (0) target = $region45
    $region44: #{tpu_custom_call.1} parent=1 // pred_region
      %81 = dma.done [#allocation9], 2048
    $region45: #{tpu_custom_call.1} parent=1 // pred_fallthru
      _
    %v82 = vld [vmem:[#allocation2] sm:$0xff]
    %v83 = vld [vmem:[#allocation2 + $0x8] sm:$0xff]
    %v84 = vld [vmem:[#allocation5] sm:$0xff]
    %v85 = vld [vmem:[#allocation5 + $0x8] sm:$0xff]
    %v86 = vld [vmem:[%s2] sm:$0x1]
    %v88 = vlaneseq
    %v89 = vshrl.u32 %v88, 7
    %v90 = vsub.s32 0, %v89
    %v91 = vrot.slane %v86, %v90
    %vm93 = vcmask 130048
    %v95 = vsel %vm93, %v82, 0
    %v98 = vsel %vm93, %v83, 0
    %100 = vmatprep.subr.mxu0 0.0
    %101 = vmatpush1.msra.mxu0 %v84
    %102 = vmatprep.subr.mxu0 0.0
    %103 = vmatpush1.msra.mxu0 %v85
    %104 = vmatprep.subr.mxu0 0.0
    %105 = vmatpush1.msra.mxu0 0.0
    %106 = vmatprep.subr.mxu0 0.0
    %107 = vmatpush1.msra.mxu0 0.0
    %108 = vmatprep.subr.mxu0 0.0
    %109 = vmatpush1.msra.mxu0 0.0
    %110 = vmatprep.subr.mxu0 0.0
    %111 = vmatpush1.msra.mxu0 0.0
    %112 = vmatprep.subr.mxu0 0.0
    %113 = vmatpush1.msra.mxu0 0.0
    %114 = vmatprep.subr.mxu0 0.0
    %115 = vmatpush1.msra.mxu0 0.0
    %116 = vmatprep.subr.mxu0 0.0
    %117 = vmatpush1.msra.mxu0 0.0
    %118 = vmatprep.subr.mxu0 0.0
    %119 = vmatpush1.msra.mxu0 0.0
    %120 = vmatprep.subr.mxu0 0.0
    %121 = vmatpush1.msra.mxu0 0.0
    %122 = vmatprep.subr.mxu0 0.0
    %123 = vmatpush1.msra.mxu0 0.0
    %124 = vmatprep.subr.mxu0 0.0
    %125 = vmatpush1.msra.mxu0 0.0
    %126 = vmatprep.subr.mxu0 0.0
    %127 = vmatpush1.msra.mxu0 0.0
    %128 = vmatprep.subr.mxu0 0.0
    %129 = vmatpush1.msra.mxu0 0.0
    %130 = vmatprep.subr.mxu0 0.0
    %131 = vmatpush1.msra.mxu0 0.0
    %132 = vmatprep.subr.mxu0 0.0
    %133 = vmatpush1.msra.mxu0 0.0
    %134 = vmatprep.subr.mxu0 0.0
    %135 = vmatpush1.msra.mxu0 0.0
    %136 = vmatprep.subr.mxu0 0.0
    %137 = vmatpush1.msra.mxu0 0.0
    %138 = vmatprep.subr.mxu0 0.0
    %139 = vmatpush1.msra.mxu0 0.0
    %140 = vmatprep.subr.mxu0 0.0
    %141 = vmatpush1.msra.mxu0 0.0
    %142 = vmatprep.subr.mxu0 0.0
    %143 = vmatpush1.msra.mxu0 0.0
    %144 = vmatprep.subr.mxu0 0.0
    %145 = vmatpush1.msra.mxu0 0.0
    %146 = vmatprep.subr.mxu0 0.0
    %147 = vmatpush1.msra.mxu0 0.0
    %148 = vmatprep.subr.mxu0 0.0
    %149 = vmatpush1.msra.mxu0 0.0
    %150 = vmatprep.subr.mxu0 0.0
    %151 = vmatpush1.msra.mxu0 0.0
    %152 = vmatprep.subr.mxu0 0.0
    %153 = vmatpush1.msra.mxu0 0.0
    %154 = vmatprep.subr.mxu0 0.0
    %155 = vmatpush1.msra.mxu0 0.0
    %156 = vmatprep.subr.mxu0 0.0
    %157 = vmatpush1.msra.mxu0 0.0
    %158 = vmatprep.subr.mxu0 0.0
    %159 = vmatpush1.msra.mxu0 0.0
    %160 = vmatprep.subr.mxu0 0.0
    %161 = vmatpush1.msra.mxu0 0.0
    %162 = vmatprep.subr.mxu0 0.0
    %163 = vmatpush1.msra.mxu0 0.0
    %164 = vmatprep.mubr.f32.mxu0 0.0
    %165 = vmatmul.mubr.f32.gmra.mrb[0].mxu0 %v95
    %v166 = vpop.f32.mrb[0].mxu0
    %v167 = vadd.f32 %v91, %v166
    %v168 = vpop.f32.mrb[0].mxu0
    %169 = vmatprep.mubr.f32.mxu0 0.0
    %170 = vmatmul.mubr.f32.gmra.mrb[0].mxu0 %v98
    %v171 = vpop.f32.mrb[0].mxu0
    %v172 = vadd.f32 %v91, %v171
    %v173 = vpop.f32.mrb[0].mxu0
    %174 = vdwg.mxu0
    %v175 = vmax.f32 %v167, 0.0
    %v176 = vmax.f32 %v172, 0.0
    %v177 = vld [vmem:[#allocation7] sm:$0xff]
    %v178 = vld [vmem:[#allocation7 + $0x8] sm:$0xff]
    %v179 = vld [vmem:[#allocation7 + $0x10] sm:$0xff]
    %v180 = vld [vmem:[#allocation7 + $0x18] sm:$0xff]
    %v181 = vld [vmem:[#allocation7 + $0x20] sm:$0xff]
    %v182 = vld [vmem:[#allocation7 + $0x28] sm:$0xff]
    %v183 = vld [vmem:[#allocation7 + $0x30] sm:$0xff]
    %v184 = vld [vmem:[#allocation7 + $0x38] sm:$0xff]
    %v185 = vld [vmem:[#allocation7 + $0x40] sm:$0xff]
    %v186 = vld [vmem:[#allocation7 + $0x48] sm:$0xff]
    %v187 = vld [vmem:[#allocation7 + $0x50] sm:$0xff]
    %v188 = vld [vmem:[#allocation7 + $0x58] sm:$0xff]
    %v189 = vld [vmem:[#allocation7 + $0x60] sm:$0xff]
    %v190 = vld [vmem:[#allocation7 + $0x68] sm:$0xff]
    %v191 = vld [vmem:[#allocation7 + $0x70] sm:$0xff]
    %v192 = vld [vmem:[#allocation7 + $0x78] sm:$0xff]
    %v193 = vld [vmem:[%s4] sm:$0x1]
    %v195 = vlaneseq
    %v196 = vshrl.u32 %v195, 7
    %v197 = vsub.s32 0, %v196
    %v198 = vrot.slane %v193, %v197
    %200 = vmatprep.subr.mxu0 0.0
    %201 = vmatpush1.msra.mxu0 %v177
    %202 = vmatprep.subr.mxu0 0.0
    %203 = vmatpush1.msra.mxu0 %v178
    %204 = vmatprep.subr.mxu0 0.0
    %205 = vmatpush1.msra.mxu0 %v179
    %206 = vmatprep.subr.mxu0 0.0
    %207 = vmatpush1.msra.mxu0 %v180
    %208 = vmatprep.subr.mxu0 0.0
    %209 = vmatpush1.msra.mxu0 %v181
    %210 = vmatprep.subr.mxu0 0.0
    %211 = vmatpush1.msra.mxu0 %v182
    %212 = vmatprep.subr.mxu0 0.0
    %213 = vmatpush1.msra.mxu0 %v183
    %214 = vmatprep.subr.mxu0 0.0
    %215 = vmatpush1.msra.mxu0 %v184
    %216 = vmatprep.subr.mxu0 0.0
    %217 = vmatpush1.msra.mxu0 %v185
    %218 = vmatprep.subr.mxu0 0.0
    %219 = vmatpush1.msra.mxu0 %v186
    %220 = vmatprep.subr.mxu0 0.0
    %221 = vmatpush1.msra.mxu0 %v187
    %222 = vmatprep.subr.mxu0 0.0
    %223 = vmatpush1.msra.mxu0 %v188
    %224 = vmatprep.subr.mxu0 0.0
    %225 = vmatpush1.msra.mxu0 %v189
    %226 = vmatprep.subr.mxu0 0.0
    %227 = vmatpush1.msra.mxu0 %v190
    %228 = vmatprep.subr.mxu0 0.0
    %229 = vmatpush1.msra.mxu0 %v191
    %230 = vmatprep.subr.mxu0 0.0
    %231 = vmatpush1.msra.mxu0 %v192
    %232 = vmatprep.subr.mxu0 0.0
    %233 = vmatpush1.msra.mxu0 0.0
    %234 = vmatprep.subr.mxu0 0.0
    %235 = vmatpush1.msra.mxu0 0.0
    %236 = vmatprep.subr.mxu0 0.0
    %237 = vmatpush1.msra.mxu0 0.0
    %238 = vmatprep.subr.mxu0 0.0
    %239 = vmatpush1.msra.mxu0 0.0
    %240 = vmatprep.subr.mxu0 0.0
    %241 = vmatpush1.msra.mxu0 0.0
    %242 = vmatprep.subr.mxu0 0.0
    %243 = vmatpush1.msra.mxu0 0.0
    %244 = vmatprep.subr.mxu0 0.0
    %245 = vmatpush1.msra.mxu0 0.0
    %246 = vmatprep.subr.mxu0 0.0
    %247 = vmatpush1.msra.mxu0 0.0
    %248 = vmatprep.subr.mxu0 0.0
    %249 = vmatpush1.msra.mxu0 0.0
    %250 = vmatprep.subr.mxu0 0.0
    %251 = vmatpush1.msra.mxu0 0.0
    %252 = vmatprep.subr.mxu0 0.0
    %253 = vmatpush1.msra.mxu0 0.0
    %254 = vmatprep.subr.mxu0 0.0
    %255 = vmatpush1.msra.mxu0 0.0
    %256 = vmatprep.subr.mxu0 0.0
    %257 = vmatpush1.msra.mxu0 0.0
    %258 = vmatprep.subr.mxu0 0.0
    %259 = vmatpush1.msra.mxu0 0.0
    %260 = vmatprep.subr.mxu0 0.0
    %261 = vmatpush1.msra.mxu0 0.0
    %262 = vmatprep.subr.mxu0 0.0
    %263 = vmatpush1.msra.mxu0 0.0
    %264 = vmatprep.mubr.f32.mxu0 0.0
    %265 = vmatmul.mubr.f32.gmra.mrb[0].mxu0 %v175
    %v266 = vpop.f32.mrb[0].mxu0
    %v267 = vadd.f32 %v198, %v266
    %v268 = vpop.f32.mrb[0].mxu0
    %269 = vmatprep.mubr.f32.mxu0 0.0
    %270 = vmatmul.mubr.f32.gmra.mrb[0].mxu0 %v176
    %v271 = vpop.f32.mrb[0].mxu0
    %v272 = vadd.f32 %v198, %v271
    %v273 = vpop.f32.mrb[0].mxu0
    %274 = vdwg.mxu0
    %v275 = vmax.f32 %v267, 0.0
    %v276 = vmax.f32 %v272, 0.0
    %v277 = vld [vmem:[#allocation8] sm:$0xff]
    %v278 = vld [vmem:[#allocation8 + $0x8] sm:$0xff]
    %v279 = vld [vmem:[#allocation8 + $0x10] sm:$0xff]
    %v280 = vld [vmem:[#allocation8 + $0x18] sm:$0xff]
    %v281 = vld [vmem:[#allocation8 + $0x20] sm:$0xff]
    %v282 = vld [vmem:[#allocation8 + $0x28] sm:$0xff]
    %v283 = vld [vmem:[#allocation8 + $0x30] sm:$0xff]
    %v284 = vld [vmem:[#allocation8 + $0x38] sm:$0xff]
    %v285 = vld [vmem:[#allocation8 + $0x40] sm:$0xff]
    %v286 = vld [vmem:[#allocation8 + $0x48] sm:$0xff]
    %v287 = vld [vmem:[#allocation8 + $0x50] sm:$0xff]
    %v288 = vld [vmem:[#allocation8 + $0x58] sm:$0xff]
    %v289 = vld [vmem:[#allocation8 + $0x60] sm:$0xff]
    %v290 = vld [vmem:[#allocation8 + $0x68] sm:$0xff]
    %v291 = vld [vmem:[#allocation8 + $0x70] sm:$0xff]
    %v292 = vld [vmem:[#allocation8 + $0x78] sm:$0xff]
    %v293 = vld [vmem:[%s6] sm:$0x1]
    %v295 = vlaneseq
    %v296 = vshrl.u32 %v295, 7
    %v297 = vsub.s32 0, %v296
    %v298 = vrot.slane %v293, %v297
    %300 = vmatprep.subr.mxu0 0.0
    %301 = vmatpush1.msra.mxu0 %v277
    %302 = vmatprep.subr.mxu0 0.0
    %303 = vmatpush1.msra.mxu0 %v278
    %304 = vmatprep.subr.mxu0 0.0
    %305 = vmatpush1.msra.mxu0 %v279
    %306 = vmatprep.subr.mxu0 0.0
    %307 = vmatpush1.msra.mxu0 %v280
    %308 = vmatprep.subr.mxu0 0.0
    %309 = vmatpush1.msra.mxu0 %v281
    %310 = vmatprep.subr.mxu0 0.0
    %311 = vmatpush1.msra.mxu0 %v282
    %312 = vmatprep.subr.mxu0 0.0
    %313 = vmatpush1.msra.mxu0 %v283
    %314 = vmatprep.subr.mxu0 0.0
    %315 = vmatpush1.msra.mxu0 %v284
    %316 = vmatprep.subr.mxu0 0.0
    %317 = vmatpush1.msra.mxu0 %v285
    %318 = vmatprep.subr.mxu0 0.0
    %319 = vmatpush1.msra.mxu0 %v286
    %320 = vmatprep.subr.mxu0 0.0
    %321 = vmatpush1.msra.mxu0 %v287
    %322 = vmatprep.subr.mxu0 0.0
    %323 = vmatpush1.msra.mxu0 %v288
    %324 = vmatprep.subr.mxu0 0.0
    %325 = vmatpush1.msra.mxu0 %v289
    %326 = vmatprep.subr.mxu0 0.0
    %327 = vmatpush1.msra.mxu0 %v290
    %328 = vmatprep.subr.mxu0 0.0
    %329 = vmatpush1.msra.mxu0 %v291
    %330 = vmatprep.subr.mxu0 0.0
    %331 = vmatpush1.msra.mxu0 %v292
    %332 = vmatprep.subr.mxu0 0.0
    %333 = vmatpush1.msra.mxu0 0.0
    %334 = vmatprep.subr.mxu0 0.0
    %335 = vmatpush1.msra.mxu0 0.0
    %336 = vmatprep.subr.mxu0 0.0
    %337 = vmatpush1.msra.mxu0 0.0
    %338 = vmatprep.subr.mxu0 0.0
    %339 = vmatpush1.msra.mxu0 0.0
    %340 = vmatprep.subr.mxu0 0.0
    %341 = vmatpush1.msra.mxu0 0.0
    %342 = vmatprep.subr.mxu0 0.0
    %343 = vmatpush1.msra.mxu0 0.0
    %344 = vmatprep.subr.mxu0 0.0
    %345 = vmatpush1.msra.mxu0 0.0
    %346 = vmatprep.subr.mxu0 0.0
    %347 = vmatpush1.msra.mxu0 0.0
    %348 = vmatprep.subr.mxu0 0.0
    %349 = vmatpush1.msra.mxu0 0.0
    %350 = vmatprep.subr.mxu0 0.0
    %351 = vmatpush1.msra.mxu0 0.0
    %352 = vmatprep.subr.mxu0 0.0
    %353 = vmatpush1.msra.mxu0 0.0
    %354 = vmatprep.subr.mxu0 0.0
    %355 = vmatpush1.msra.mxu0 0.0
    %356 = vmatprep.subr.mxu0 0.0
    %357 = vmatpush1.msra.mxu0 0.0
    %358 = vmatprep.subr.mxu0 0.0
    %359 = vmatpush1.msra.mxu0 0.0
    %360 = vmatprep.subr.mxu0 0.0
    %361 = vmatpush1.msra.mxu0 0.0
    %362 = vmatprep.subr.mxu0 0.0
    %363 = vmatpush1.msra.mxu0 0.0
    %364 = vmatprep.mubr.f32.mxu0 0.0
    %365 = vmatmul.mubr.f32.gmra.mrb[0].mxu0 %v275
    %v366 = vpop.f32.mrb[0].mxu0
    %v367 = vadd.f32 %v298, %v366
    %v368 = vpop.f32.mrb[0].mxu0
    %369 = vmatprep.mubr.f32.mxu0 0.0
    %370 = vmatmul.mubr.f32.gmra.mrb[0].mxu0 %v276
    %v371 = vpop.f32.mrb[0].mxu0
    %v372 = vadd.f32 %v298, %v371
    %v373 = vpop.f32.mrb[0].mxu0
    %374 = vdwg.mxu0
    %v375 = vmul.f32 %v367, 1.442695
    %v376 = vpow.pop %v375
    %v377 = vmul.f32 %v372, 1.442695
    %v378 = vpow.pop %v377
    %379 = vst [vmem:[#allocation10] sm:$0xff] %v376
    %380 = vst [vmem:[#allocation10 + $0x8] sm:$0xff] %v378
    // Predicated region
    $region46: #{tpu_custom_call.1} parent=1 // pred_check
      _
    $region47: #{tpu_custom_call.1} parent=1 // pred_check_branch
      %382 = sbr.rel (0) target = $region49
    $region48: #{tpu_custom_call.1} parent=1 // pred_region
      %s384 = ssub.s32 256, 256
      %385 = vsyncadd [#allocation4], %s384
      %s386 = sshll.u32 [#allocation10], 4
      %s387 = int_to_ptr.vmem [resolvable:$true] %s386
      %392 = dma.vmem_to_hbm [thread:$0]  %s387, 256, %s7, [#allocation4], 128, 128, 8
    $region49: #{tpu_custom_call.1} parent=1 // pred_fallthru
      _
    // Predicated region
    $region50: #{tpu_custom_call.1} parent=1 // pred_check
      _
    $region51: #{tpu_custom_call.1} parent=1 // pred_check_branch
      %394 = sbr.rel (0) target = $region53
    $region52: #{tpu_custom_call.1} parent=1 // pred_region
      %395 = dma.done [#allocation4], 256
    $region53: #{tpu_custom_call.1} parent=1 // pred_fallthru
      _
    %396 = vsyncpa [#allocation3], 1
    %397 = vsyncpa [#allocation6], 1
    %398 = vsyncpa [#allocation9], 1
    %399 = vsyncpa [#allocation4], 1

</llo_original>
